<compile_context>
chip_gen: v7x
topology: tpu7x:2x2x1
jax: 0.10.0
libtpu: 0.0.40
codegen_flags: <defaults>
</compile_context>

<pallas_src>
import functools

import jax
import jax.numpy as jnp
from jax.experimental import pallas as pl
from jax.experimental.pallas import tpu as pltpu

EPS = 1e-12  # F.normalize default eps


def _round_up(x, m):
    return ((x + m - 1) // m) * m


def _l2_normalize_f32(x):
    """rsqrt-based L2 normalize matching F.normalize(x, p=2, eps=1e-12)."""
    x = x.astype(jnp.float32)
    sumsq = jnp.sum(x * x, axis=-1, keepdims=True)
    return x * jax.lax.rsqrt(jnp.maximum(sumsq, EPS * EPS))


# --------------------------------------------------------------------------
# Kernel 1: per-query coefficients + positive scores (1-D grid over Q tiles).
# --------------------------------------------------------------------------
def _coef_pos_kernel(q_ref, p_ref, rel_ref, mask_ref, coef_ref, pos_ref):
    q = q_ref[...].astype(jnp.float32)        # (TQ, d)
    p = p_ref[...].astype(jnp.float32)        # (TQ, d)
    rel = rel_ref[...].astype(jnp.float32)    # (TQ, d)
    is_head = mask_ref[...] > 0               # (TQ, 1) bool

    d = q.shape[-1]
    half = d // 2
    # NOTE: when production d//2 is a multiple of 128 these Re/Im slices and
    # the half-writes below are zero-cost lane views; otherwise they lower to
    # masked stores (still correct, tiny cost since the prologue is O(Q*d)).

    qn = _l2_normalize_f32(q)
    pn = _l2_normalize_f32(p)

    q_re, q_im = qn[:, :half], qn[:, half:]
    p_re, p_im = pn[:, :half], pn[:, half:]
    r_re, r_im = rel[:, :half], rel[:, half:]

    # Shared sub-expressions: 4 multiplies, then selects/adds.
    rrqr = r_re * q_re
    rrqi = r_re * q_im
    riqr = r_im * q_re
    riqi = r_im * q_im
    zero = jnp.zeros_like(rrqr)
    a = rrqr + jnp.where(is_head, riqi, zero)
    b = rrqi - riqi + jnp.where(is_head, zero, riqr)

    # Positive score in f32 (exact); (TQ, 1) store is O(Q) once-only.
    pos_ref[...] = -(jnp.sum(a * p_re, axis=-1, keepdims=True)
                     + jnp.sum(b * p_im, axis=-1, keepdims=True))

    # Write the two halves of coef directly (no jnp.concatenate relayout).
    coef_ref[:, :half] = a.astype(coef_ref.dtype)
    coef_ref[:, half:] = b.astype(coef_ref.dtype)


# --------------------------------------------------------------------------
# Kernel 2: negative scores.  coef_ref is either the full (Qp, d) resident
# block or a (tq, d) tile; negs_ref is a raw (TN, d) tile that is normalized
# in-kernel (so the HBM negatives are read exactly once, un-preprocessed).
# --------------------------------------------------------------------------
def _neg_score_kernel(coef_ref, negs_ref, out_ref):
    negs = negs_ref[...].astype(jnp.float32)                       # (TN, d)
    sumsq = jnp.sum(negs * negs, axis=-1, keepdims=True)
    negs_n = (negs * jax.lax.rsqrt(jnp.maximum(sumsq, EPS * EPS))
              ).astype(coef_ref.dtype)
    scores = jax.lax.dot_general(                                  # (M, TN)
        coef_ref[...], negs_n,
        dimension_numbers=(((1,), (1,)), ((), ())),                # contract d
        preferred_element_type=jnp.float32)
    out_ref[...] = (-scores).astype(out_ref.dtype)


# --------------------------------------------------------------------------
# Wrapper.
# --------------------------------------------------------------------------
def complex_decoder_forward(query_embeds, pos_target_embeds, neg_target_embeds,
                            r_type, is_head_prediction, relation_weight,
                            add_batch_to_negs=False,
                            matmul_dtype=jnp.bfloat16,
                            out_dtype=None,
                            tq_max=512, tn_max=2048,
                            vmem_budget_bytes=24 * 1024 * 1024):
    """JAX/Pallas equivalent of ComplExDecoder.forward.

    Returns (pos_scores (Q,), neg_scores (Q, N)); neg_scores dtype is
    `out_dtype` (defaults to `matmul_dtype`, bf16).  Pass
    matmul_dtype=out_dtype=float32 for exact eval paths.
    """
    Q, d = query_embeds.shape
    assert d % 2 == 0
    if out_dtype is None:
        out_dtype = matmul_dtype

    # Glue kept in plain JAX: relation-embedding lookup + batch-negatives cat.
    # TODO(synk): the gather could be folded into the prologue via
    # PrefetchScalarGridSpec + per-row blocks; kept as jnp.take for clarity.
    relation_embeds = jnp.take(relation_weight, r_type, axis=0)       # (Q, d)
    negs = neg_target_embeds
    if add_batch_to_negs:
        # Relies on the negative pool being shared across queries, matching
        # the reference's expand+cat of the same batch positives.
        negs = jnp.concatenate([negs, pos_target_embeds], axis=0)
    N = negs.shape[0]

    # ---- tile sizes & padding ----------------------------------------------
    tq = min(tq_max, _round_up(Q, 16))          # mult of 16 (bf16 sublanes)
    Qp = _round_up(Q, tq)

    mm_b = jnp.dtype(matmul_dtype).itemsize
    in_b = jnp.dtype(negs.dtype).itemsize
    out_b = jnp.dtype(out_dtype).itemsize

    tn_cap = min(tn_max, _round_up(N, 128))
    tn_candidates = [tn_cap] + [c for c in (2048, 1024, 512, 256, 128)
                                if c < tn_cap]

    # Conservative VMEM estimate: double-buffered coef/negs/out blocks plus
    # in-kernel f32 temporaries (normalized negatives + f32 accumulator).
    def _need(block_m, tn):
        return (2 * block_m * d * mm_b            # coef block(s)
                + 2 * tn * d * in_b               # raw negatives tile
                + 2 * block_m * tn * out_b        # output tile
                + tn * d * 4                      # f32 normalized negatives
                + block_m * tn * 4)               # f32 matmul result

    plan = None
    for tn in tn_candidates:                      # preferred: coef resident
        if _need(Qp, tn) <= vmem_budget_bytes:
            plan = ("resident", tn, _need(Qp, tn))
            break
    if plan is None:                              # fallback: tiled, N outer
        for tn in tn_candidates:
            if _need(tq, tn) <= vmem_budget_bytes:
                plan = ("tiled", tn, _need(tq, tn))
                break
        if plan is None:
            plan = ("tiled", 128, _need(tq, 128))
    mode, tn, vmem_need = plan
    Np = _round_up(N, tn)

    def pad_rows(x, rows):
        return jnp.pad(x, ((0, rows - x.shape[0]), (0, 0)))

    q_p = pad_rows(query_embeds.astype(jnp.float32), Qp)
    p_p = pad_rows(pos_target_embeds.astype(jnp.float32), Qp)
    rel_p = pad_rows(relation_embeds.astype(jnp.float32), Qp)
    mask_p = pad_rows(is_head_prediction.astype(jnp.int32).reshape(Q, 1), Qp)
    negs_p = pad_rows(negs, Np)   # raw dtype; normalized inside the kernel

    # ---- prologue: coefficients + positive scores --------------------------
    coef, pos_col = pl.pallas_call(
        _coef_pos_kernel,
        out_shape=(jax.ShapeDtypeStruct((Qp, d), matmul_dtype),
                   jax.ShapeDtypeStruct((Qp, 1), jnp.float32)),
        grid=(Qp // tq,),
        in_specs=[pl.BlockSpec((tq, d), lambda i: (i, 0)),
                  pl.BlockSpec((tq, d), lambda i: (i, 0)),
                  pl.BlockSpec((tq, d), lambda i: (i, 0)),
                  pl.BlockSpec((tq, 1), lambda i: (i, 0))],
        out_specs=(pl.BlockSpec((tq, d), lambda i: (i, 0)),
                   pl.BlockSpec((tq, 1), lambda i: (i, 0))),
        compiler_params=pltpu.CompilerParams(
            dimension_semantics=("parallel",)),
    )(q_p, p_p, rel_p, mask_p)

    # ---- main: negative scores ----------------------------------------------
    # Explicit VMEM limit: covers v5e's 16 MiB scoped default and stays well
    # under v7x's 64 MiB physical VMEM (budget defaults to 24 MiB + margin).
    vmem_limit = int(max(vmem_need + (4 << 20), 16 << 20))

    if mode == "resident":
        # coef is a single resident block; 1-D grid over N => every HBM byte
        # (coef, raw negatives, output) touched exactly once.
        cost = pl.CostEstimate(
            flops=2 * Qp * Np * d,
            transcendentals=Np,
            bytes_accessed=Qp * d * mm_b + Np * d * in_b + Qp * Np * out_b)
        neg_dist = pl.pallas_call(
            _neg_score_kernel,
            out_shape=jax.ShapeDtypeStruct((Qp, Np), out_dtype),
            grid=(Np // tn,),
            in_specs=[pl.BlockSpec((Qp, d), lambda j: (0, 0)),
                      pl.BlockSpec((tn, d), lambda j: (j, 0))],
            out_specs=pl.BlockSpec((Qp, tn), lambda j: (0, j)),
            compiler_params=pltpu.CompilerParams(
                dimension_semantics=("parallel",),
                vmem_limit_bytes=vmem_limit),
            cost_estimate=cost,
        )(coef, negs_p)
    else:
        # 2-D grid with N OUTER: each negatives tile is fetched once (block
        # index constant across the inner Q axis); only the small coef
        # re-streams (Qp*d per N tile).  Normalize recompute per Q tile is
        # cheap VPU work next to the matmul.
        # TODO(synk): if a profile shows exposed DMA here, add
        # pipeline_mode=pl.Buffered(3) on the coef BlockSpec.
        n_qt, n_nt = Qp // tq, Np // tn
        cost = pl.CostEstimate(
            flops=2 * Qp * Np * d,
            transcendentals=Np * n_qt,
            bytes_accessed=Qp * d * mm_b * n_nt + Np * d * in_b
                           + Qp * Np * out_b)
        neg_dist = pl.pallas_call(
            _neg_score_kernel,
            out_shape=jax.ShapeDtypeStruct((Qp, Np), out_dtype),
            grid=(n_nt, n_qt),
            in_specs=[pl.BlockSpec((tq, d), lambda i, j: (j, 0)),
                      pl.BlockSpec((tn, d), lambda i, j: (i, 0))],
            out_specs=pl.BlockSpec((tq, tn), lambda i, j: (j, i)),
            compiler_params=pltpu.CompilerParams(
                dimension_semantics=("parallel", "parallel"),
                vmem_limit_bytes=vmem_limit),
            cost_estimate=cost,
        )(coef, negs_p)

    return pos_col[:Q, 0], neg_dist[:Q, :N]


# -------------- pure-JAX reference (mirrors the PyTorch module) -------------
def _reference_forward(query, pos, neg, r_type, is_head, relation_weight,
                       add_batch_to_negs=False):
    rel = relation_weight[r_type]
    Q, d = query.shape
    m = is_head.reshape(-1, 1)
    head = jnp.where(m, pos, query)
    tail = jnp.where(m, query, pos)
    negs = jnp.broadcast_to(neg[None], (Q, neg.shape[0], d))
    if add_batch_to_negs:
        negs = jnp.concatenate(
            [negs, jnp.broadcast_to(pos[None], (Q, Q, d))], axis=1)
    qb = jnp.broadcast_to(query[:, None, :], negs.shape)
    m3 = is_head.reshape(-1, 1, 1)
    neg_head = jnp.where(m3, negs, qb)
    neg_tail = jnp.where(m3, qb, negs)

    def normalize(x):
        n = jnp.sqrt(jnp.sum(x * x, axis=-1, keepdims=True))
        return x / jnp.maximum(n, EPS)

    def dist(h, r, t):
        h = normalize(h)
        t = normalize(t)
        k = d // 2
        h_re, h_im = h[..., :k], h[..., k:]
        t_re, t_im = t[..., :k], t[..., k:]
        r_re, r_im = r[..., :k], r[..., k:]
        return (jnp.sum(r_re * h_re * t_re, -1) + jnp.sum(r_re * h_im * t_im, -1)
                + jnp.sum(r_im * h_re * t_im, -1) - jnp.sum(r_im * h_im * t_im, -1))

    pos_d = dist(head, rel, tail)
    neg_d = dist(neg_head, rel[:, None, :], neg_tail)
    return -pos_d, -neg_d


if __name__ == "__main__":
    Q, N, D = 8, 16, 32
    NUM_RELATIONS = 11

    key = jax.random.PRNGKey(0)
    k1, k2, k3, k4, k5, k6 = jax.random.split(key, 6)

    query_embeds = jax.random.normal(k1, (Q, D), dtype=jnp.float32)
    pos_target_embeds = jax.random.normal(k2, (Q, D), dtype=jnp.float32)
    neg_target_embeds = jax.random.normal(k3, (N, D), dtype=jnp.float32)
    r_type = jax.random.randint(k4, (Q,), 0, NUM_RELATIONS, dtype=jnp.int32)
    is_head_prediction = jax.random.bernoulli(k5, 0.5, (Q,))

    # nn.Embedding(num_relations, embed_dim) with xavier_uniform_ init.
    limit = (6.0 / (NUM_RELATIONS + D)) ** 0.5
    relation_weight = jax.random.uniform(
        k6, (NUM_RELATIONS, D), minval=-limit, maxval=limit, dtype=jnp.float32)

    args = (query_embeds, pos_target_embeds, neg_target_embeds, r_type,
            is_head_prediction, relation_weight)

    # (1) exact f32 path, no batch negatives.
    fwd_f32 = jax.jit(functools.partial(
        complex_decoder_forward, add_batch_to_negs=False,
        matmul_dtype=jnp.float32, out_dtype=jnp.float32))
    pos_f, neg_f = jax.block_until_ready(fwd_f32(*args))
    ref_pos, ref_neg = _reference_forward(*args, add_batch_to_negs=False)
    assert pos_f.shape == (Q,) and neg_f.shape == (Q, N)
    assert jnp.allclose(pos_f, ref_pos, atol=1e-5, rtol=1e-5)
    assert jnp.allclose(neg_f, ref_neg, atol=1e-2, rtol=1e-2)

    # (2) exact f32 path with add_batch_to_negs=True.
    fwd_f32_ab = jax.jit(functools.partial(
        complex_decoder_forward, add_batch_to_negs=True,
        matmul_dtype=jnp.float32, out_dtype=jnp.float32))
    pos_ab, neg_ab = jax.block_until_ready(fwd_f32_ab(*args))
    ref_pos_ab, ref_neg_ab = _reference_forward(*args, add_batch_to_negs=True)
    assert neg_ab.shape == (Q, N + Q)
    assert jnp.allclose(pos_ab, ref_pos_ab, atol=1e-5, rtol=1e-5)
    assert jnp.allclose(neg_ab, ref_neg_ab, atol=1e-2, rtol=1e-2)

    # (3) default bf16 MXU + bf16 score output (perf configuration):
    #     positives stay exact f32; negatives checked at bf16 tolerance.
    fwd_bf16 = jax.jit(functools.partial(
        complex_decoder_forward, add_batch_to_negs=False))
    pos_b, neg_b = jax.block_until_ready(fwd_bf16(*args))
    assert pos_b.shape == (Q,) and neg_b.shape == (Q, N)
    assert neg_b.dtype == jnp.bfloat16
    assert jnp.allclose(pos_b, ref_pos, atol=1e-5, rtol=1e-5)
    assert jnp.allclose(neg_b.astype(jnp.float32), ref_neg, atol=3e-2, rtol=3e-2)

    print("KERNEL_OK")
</pallas_src>

<mosaic_0001>
module attributes {stable_mosaic.version = 11 : i64} {
  func.func @_neg_score_kernel(%arg0: i32, %arg1: memref<16x32xf32, #tpu.memory_space<vmem>>, %arg2: memref<128x32xf32, #tpu.memory_space<vmem>>, %arg3: memref<16x128xf32, #tpu.memory_space<vmem>>) attributes {dimension_semantics = [#tpu.dimension_semantics<parallel>], iteration_bounds = array<i64: 1>, scalar_prefetch = 0 : i64, scratch_operands = 0 : i64, tpu.core_type = #tpu.core_type<tc>, window_params = [{pipeline_mode = #tpu.pipeline_mode<synchronous>, transform_indices = @transform_0, window_bounds = array<i64: 16, 32>}, {transform_indices = @transform_1, window_bounds = array<i64: 128, 32>}, {transform_indices = @transform_2, window_bounds = array<i64: 16, 128>}]} {
    %c0 = arith.constant 0 : index
    %c0_0 = arith.constant 0 : index
    %0 = vector.load %arg2[%c0, %c0_0] : memref<128x32xf32, #tpu.memory_space<vmem>>, vector<128x32xf32>
    %1 = arith.mulf %0, %0 : vector<128x32xf32>
    %cst = arith.constant dense<0.000000e+00> : vector<128xf32>
    %2 = vector.multi_reduction <add>, %1, %cst [1] : vector<128x32xf32> to vector<128xf32>
    %3 = vector.shape_cast %2 : vector<128xf32> to vector<128x1xf32>
    %cst_1 = arith.constant 1.000000e-24 : f32
    %4 = vector.broadcast %cst_1 : f32 to vector<128x1xf32>
    %5 = arith.maximumf %3, %4 : vector<128x1xf32>
    %6 = math.rsqrt %5 : vector<128x1xf32>
    %7 = vector.broadcast %6 : vector<128x1xf32> to vector<128x32xf32>
    %8 = arith.mulf %0, %7 : vector<128x32xf32>
    %c0_2 = arith.constant 0 : index
    %c0_3 = arith.constant 0 : index
    %9 = vector.load %arg1[%c0_2, %c0_3] : memref<16x32xf32, #tpu.memory_space<vmem>>, vector<16x32xf32>
    %cst_4 = arith.constant dense<0.000000e+00> : vector<16x128xf32>
    %10 = tpu.matmul %9, %8, %cst_4 {dimension_numbers = #tpu.dot_dimension_numbers<[1], [1], [0], [0], [0, 0, 1, 0], [], []>} : vector<16x32xf32>, vector<128x32xf32>, vector<16x128xf32> -> vector<16x128xf32>
    %cst_5 = arith.constant 0.000000e+00 : f32
    %11 = vector.broadcast %cst_5 : f32 to vector<16x128xf32>
    %12 = arith.subf %11, %10 : vector<16x128xf32>
    %c0_6 = arith.constant 0 : index
    %c0_7 = arith.constant 0 : index
    %13 = vector.load %arg3[%c0_6, %c0_7] : memref<16x128xf32, #tpu.memory_space<vmem>>, vector<16x128xf32>
    tpu.vector_store %arg3[%c0_6, %c0_7], %12 {strides = array<i32>} : memref<16x128xf32, #tpu.memory_space<vmem>>, vector<16x128xf32>,
    return
  }
  func.func @transform_0(%arg0: i32) -> (i32, i32) {
    %c0_i32 = arith.constant 0 : i32
    %c0_i32_0 = arith.constant 0 : i32
    %c0_i32_1 = arith.constant 0 : i32
    return %c0_i32, %c0_i32_0 : i32, i32
  }
  func.func @transform_1(%arg0: i32) -> (i32, i32) {
    %c0_i32 = arith.constant 0 : i32
    %c0_i32_0 = arith.constant 0 : i32
    return %arg0, %c0_i32 : i32, i32
  }
  func.func @transform_2(%arg0: i32) -> (i32, i32) {
    %c0_i32 = arith.constant 0 : i32
    %c0_i32_0 = arith.constant 0 : i32
    return %c0_i32, %arg0 : i32, i32
  }
}

module attributes {stable_mosaic.version = 11 : i64} {
  func.func @_coef_pos_kernel(%arg0: i32, %arg1: memref<16x32xf32, #tpu.memory_space<vmem>>, %arg2: memref<16x32xf32, #tpu.memory_space<vmem>>, %arg3: memref<16x32xf32, #tpu.memory_space<vmem>>, %arg4: memref<16x1xi32, #tpu.memory_space<vmem>>, %arg5: memref<16x32xf32, #tpu.memory_space<vmem>>, %arg6: memref<16x1xf32, #tpu.memory_space<vmem>>) attributes {dimension_semantics = [#tpu.dimension_semantics<parallel>], iteration_bounds = array<i64: 1>, scalar_prefetch = 0 : i64, scratch_operands = 0 : i64, tpu.core_type = #tpu.core_type<tc>, window_params = [{transform_indices = @transform_0, window_bounds = array<i64: 16, 32>}, {transform_indices = @transform_1, window_bounds = array<i64: 16, 32>}, {transform_indices = @transform_2, window_bounds = array<i64: 16, 32>}, {transform_indices = @transform_3, window_bounds = array<i64: 16, 1>}, {transform_indices = @transform_4, window_bounds = array<i64: 16, 32>}, {transform_indices = @transform_5, window_bounds = array<i64: 16, 1>}]} {
    %c0 = arith.constant 0 : index
    %c0_0 = arith.constant 0 : index
    %0 = vector.load %arg1[%c0, %c0_0] : memref<16x32xf32, #tpu.memory_space<vmem>>, vector<16x32xf32>
    %c0_1 = arith.constant 0 : index
    %c0_2 = arith.constant 0 : index
    %1 = vector.load %arg2[%c0_1, %c0_2] : memref<16x32xf32, #tpu.memory_space<vmem>>, vector<16x32xf32>
    %c0_3 = arith.constant 0 : index
    %c0_4 = arith.constant 0 : index
    %2 = vector.load %arg3[%c0_3, %c0_4] : memref<16x32xf32, #tpu.memory_space<vmem>>, vector<16x32xf32>
    %c0_5 = arith.constant 0 : index
    %c0_6 = arith.constant 0 : index
    %3 = vector.load %arg4[%c0_5, %c0_6] : memref<16x1xi32, #tpu.memory_space<vmem>>, vector<16x1xi32>
    %c0_i32 = arith.constant 0 : i32
    %4 = vector.broadcast %c0_i32 : i32 to vector<16x1xi32>
    %5 = arith.cmpi sgt, %3, %4 : vector<16x1xi32>
    %6 = arith.mulf %0, %0 : vector<16x32xf32>
    %cst = arith.constant dense<0.000000e+00> : vector<16xf32>
    %7 = vector.multi_reduction <add>, %6, %cst [1] : vector<16x32xf32> to vector<16xf32>
    %8 = vector.shape_cast %7 : vector<16xf32> to vector<16x1xf32>
    %cst_7 = arith.constant 1.000000e-24 : f32
    %9 = vector.broadcast %cst_7 : f32 to vector<16x1xf32>
    %10 = arith.maximumf %8, %9 : vector<16x1xf32>
    %11 = math.rsqrt %10 : vector<16x1xf32>
    %12 = vector.broadcast %11 : vector<16x1xf32> to vector<16x32xf32>
    %13 = arith.mulf %0, %12 : vector<16x32xf32>
    %14 = arith.mulf %1, %1 : vector<16x32xf32>
    %cst_8 = arith.constant dense<0.000000e+00> : vector<16xf32>
    %15 = vector.multi_reduction <add>, %14, %cst_8 [1] : vector<16x32xf32> to vector<16xf32>
    %16 = vector.shape_cast %15 : vector<16xf32> to vector<16x1xf32>
    %cst_9 = arith.constant 1.000000e-24 : f32
    %17 = vector.broadcast %cst_9 : f32 to vector<16x1xf32>
    %18 = arith.maximumf %16, %17 : vector<16x1xf32>
    %19 = math.rsqrt %18 : vector<16x1xf32>
    %20 = vector.broadcast %19 : vector<16x1xf32> to vector<16x32xf32>
    %21 = arith.mulf %1, %20 : vector<16x32xf32>
    %22 = vector.extract_strided_slice %13 {offsets = [0, 0], sizes = [16, 16], strides = [1, 1]} : vector<16x32xf32> to vector<16x16xf32>
    %23 = vector.extract_strided_slice %13 {offsets = [0, 16], sizes = [16, 16], strides = [1, 1]} : vector<16x32xf32> to vector<16x16xf32>
    %24 = vector.extract_strided_slice %21 {offsets = [0, 0], sizes = [16, 16], strides = [1, 1]} : vector<16x32xf32> to vector<16x16xf32>
    %25 = vector.extract_strided_slice %21 {offsets = [0, 16], sizes = [16, 16], strides = [1, 1]} : vector<16x32xf32> to vector<16x16xf32>
    %26 = vector.extract_strided_slice %2 {offsets = [0, 0], sizes = [16, 16], strides = [1, 1]} : vector<16x32xf32> to vector<16x16xf32>
    %27 = vector.extract_strided_slice %2 {offsets = [0, 16], sizes = [16, 16], strides = [1, 1]} : vector<16x32xf32> to vector<16x16xf32>
    %28 = arith.mulf %26, %22 : vector<16x16xf32>
    %29 = arith.mulf %26, %23 : vector<16x16xf32>
    %30 = arith.mulf %27, %22 : vector<16x16xf32>
    %31 = arith.mulf %27, %23 : vector<16x16xf32>
    %cst_10 = arith.constant 0.000000e+00 : f32
    %32 = vector.broadcast %cst_10 : f32 to vector<16x16xf32>
    %33 = vector.shape_cast %5 : vector<16x1xi1> to vector<16x1xi1>
    %34 = vector.broadcast %33 : vector<16x1xi1> to vector<16x16xi1>
    %35 = arith.select %34, %31, %32 : vector<16x16xi1>, vector<16x16xf32>
    %36 = arith.addf %28, %35 : vector<16x16xf32>
    %37 = arith.subf %29, %31 : vector<16x16xf32>
    %38 = vector.shape_cast %5 : vector<16x1xi1> to vector<16x1xi1>
    %39 = vector.broadcast %38 : vector<16x1xi1> to vector<16x16xi1>
    %40 = arith.select %39, %32, %30 : vector<16x16xi1>, vector<16x16xf32>
    %41 = arith.addf %37, %40 : vector<16x16xf32>
    %42 = arith.mulf %36, %24 : vector<16x16xf32>
    %cst_11 = arith.constant dense<0.000000e+00> : vector<16xf32>
    %43 = vector.multi_reduction <add>, %42, %cst_11 [1] : vector<16x16xf32> to vector<16xf32>
    %44 = vector.shape_cast %43 : vector<16xf32> to vector<16x1xf32>
    %45 = arith.mulf %41, %25 : vector<16x16xf32>
    %cst_12 = arith.constant dense<0.000000e+00> : vector<16xf32>
    %46 = vector.multi_reduction <add>, %45, %cst_12 [1] : vector<16x16xf32> to vector<16xf32>
    %47 = vector.shape_cast %46 : vector<16xf32> to vector<16x1xf32>
    %48 = arith.addf %44, %47 : vector<16x1xf32>
    %cst_13 = arith.constant 0.000000e+00 : f32
    %49 = vector.broadcast %cst_13 : f32 to vector<16x1xf32>
    %50 = arith.subf %49, %48 : vector<16x1xf32>
    %c0_14 = arith.constant 0 : index
    %c0_15 = arith.constant 0 : index
    %51 = vector.load %arg6[%c0_14, %c0_15] : memref<16x1xf32, #tpu.memory_space<vmem>>, vector<16x1xf32>
    tpu.vector_store %arg6[%c0_14, %c0_15], %50 {strides = array<i32>} : memref<16x1xf32, #tpu.memory_space<vmem>>, vector<16x1xf32>,
    %c0_16 = arith.constant 0 : index
    %c0_17 = arith.constant 0 : index
    %52 = vector.load %arg5[%c0_16, %c0_17] : memref<16x32xf32, #tpu.memory_space<vmem>>, vector<16x16xf32>
    tpu.vector_store %arg5[%c0_16, %c0_17], %36 {strides = array<i32>} : memref<16x32xf32, #tpu.memory_space<vmem>>, vector<16x16xf32>,
    %c0_18 = arith.constant 0 : index
    %c16 = arith.constant 16 : index
    %53 = vector.load %arg5[%c0_18, %c16] : memref<16x32xf32, #tpu.memory_space<vmem>>, vector<16x16xf32>
    tpu.vector_store %arg5[%c0_18, %c16], %41 {strides = array<i32>} : memref<16x32xf32, #tpu.memory_space<vmem>>, vector<16x16xf32>,
    return
  }
  func.func @transform_0(%arg0: i32) -> (i32, i32) {
    %c0_i32 = arith.constant 0 : i32
    %c0_i32_0 = arith.constant 0 : i32
    return %arg0, %c0_i32 : i32, i32
  }
  func.func @transform_1(%arg0: i32) -> (i32, i32) {
    %c0_i32 = arith.constant 0 : i32
    %c0_i32_0 = arith.constant 0 : i32
    return %arg0, %c0_i32 : i32, i32
  }
  func.func @transform_2(%arg0: i32) -> (i32, i32) {
    %c0_i32 = arith.constant 0 : i32
    %c0_i32_0 = arith.constant 0 : i32
    return %arg0, %c0_i32 : i32, i32
  }
  func.func @transform_3(%arg0: i32) -> (i32, i32) {
    %c0_i32 = arith.constant 0 : i32
    %c0_i32_0 = arith.constant 0 : i32
    return %arg0, %c0_i32 : i32, i32
  }
  func.func @transform_4(%arg0: i32) -> (i32, i32) {
    %c0_i32 = arith.constant 0 : i32
    %c0_i32_0 = arith.constant 0 : i32
    return %arg0, %c0_i32 : i32, i32
  }
  func.func @transform_5(%arg0: i32) -> (i32, i32) {
    %c0_i32 = arith.constant 0 : i32
    %c0_i32_0 = arith.constant 0 : i32
    return %arg0, %c0_i32 : i32, i32
  }
}

</mosaic_0001>

<llo_original>
// kernel: complex_decoder_forward.2
$region0: #{complex_decoder_forward.2}
  #allocation0 [shape = 'u32[]', space=smem, size = 0x4, offset = 0x4, fixed_abs, tag = 'smem constant byte address 0x4 - core index']
  #allocation1 [shape = 'u32[144,128]{1,0:T(1,128)}', space=vmem, size = 0x12000, scoped, tag = 'internal scratch']
  %s0 = inlined_call_operand.vmem [shape: f32[16,32], index: 0, kind: input, shape index: {}]
  %s1 = inlined_call_operand.vmem [shape: f32[16,32], index: 1, kind: input, shape index: {}]
  %s2 = inlined_call_operand.vmem [shape: f32[16,32], index: 2, kind: input, shape index: {}]
  %s3 = inlined_call_operand.vmem [shape: s32[16,1], index: 3, kind: input, shape index: {}]
  %s4 = inlined_call_operand.vmem [shape: f32[16,32], index: 4, kind: output, shape index: {0}]
  %s5 = inlined_call_operand.vmem [shape: f32[16,1], index: 5, kind: output, shape index: {1}]
  %6 = xla_tuple %s4, %s5
  %s7 = sld [smem:[#allocation0]]
  $region34: #{complex_decoder_forward.2} parent=0
    _
  %s9 = ssub.s32 1, %s7
  %s10 = scalar_select 0, %s9, %s7
  // Predicated region
  $region2: #{complex_decoder_forward.2} parent=0 // pred_check
    _
  $region3: #{complex_decoder_forward.2} parent=0 // pred_check_branch
    %12 = sbr.rel (0) target = $region5
  $region4: #{complex_decoder_forward.2} parent=0 // pred_region
    _
  $region5: #{complex_decoder_forward.2} parent=0 // pred_fallthru
    _
  // Predicated region
  $region6: #{complex_decoder_forward.2} parent=0 // pred_check
    _
  $region7: #{complex_decoder_forward.2} parent=0 // pred_check_branch
    %14 = sbr.rel (0) target = $region9
  $region8: #{complex_decoder_forward.2} parent=0 // pred_region
    _
  $region9: #{complex_decoder_forward.2} parent=0 // pred_fallthru
    _
  // Predicated region
  $region10: #{complex_decoder_forward.2} parent=0 // pred_check
    _
  $region11: #{complex_decoder_forward.2} parent=0 // pred_check_branch
    %16 = sbr.rel (0) target = $region13
  $region12: #{complex_decoder_forward.2} parent=0 // pred_region
    _
  $region13: #{complex_decoder_forward.2} parent=0 // pred_fallthru
    _
  // Predicated region
  $region14: #{complex_decoder_forward.2} parent=0 // pred_check
    _
  $region15: #{complex_decoder_forward.2} parent=0 // pred_check_branch
    %18 = sbr.rel (0) target = $region17
  $region16: #{complex_decoder_forward.2} parent=0 // pred_region
    _
  $region17: #{complex_decoder_forward.2} parent=0 // pred_fallthru
    _
  %v19 = vld [vmem:[%s0] sm:$0xff]
  %v20 = vld [vmem:[%s0 + $0x8] sm:$0xff]
  %v21 = vld [vmem:[%s1] sm:$0xff]
  %v22 = vld [vmem:[%s1 + $0x8] sm:$0xff]
  %v23 = vld [vmem:[%s2] sm:$0xff]
  %v24 = vld [vmem:[%s2 + $0x8] sm:$0xff]
  %v25 = vld [vmem:[%s3] sm:$0xff]
  %v26 = vld [vmem:[%s3 + $0x8] sm:$0xff]
  %vm27 = vcmp.gt.s32.totalorder %v25, 0
  %vm28 = vcmp.gt.s32.totalorder %v26, 0
  %v29 = vmul.f32 %v19, %v19
  %v30 = vmul.f32 %v20, %v20
  %vm31 = vcmask 261120
  %v32 = vsel %vm31, %v29, 0.0
  %33 = vadd.xlane.f32.xlu0 %v32
  %v34 = vpop.xlane.xlu0 %33
  %v35 = vsel %vm31, %v30, 0.0
  %36 = vadd.xlane.f32.xlu0 %v35
  %v37 = vpop.xlane.xlu0 %36
  %v38 = vmax.f32 %v34, 1e-24
  %v39 = vmax.f32 %v37, 1e-24
  %v40 = vrsqrt.pop %v38
  %v41 = vrsqrt.pop %v39
  %v42 = vmul.f32 %v19, %v40
  %v43 = vmul.f32 %v20, %v41
  %v44 = vmul.f32 %v21, %v21
  %v45 = vmul.f32 %v22, %v22
  %v46 = vsel %vm31, %v44, 0.0
  %47 = vadd.xlane.f32.xlu0 %v46
  %v48 = vpop.xlane.xlu0 %47
  %v49 = vsel %vm31, %v45, 0.0
  %50 = vadd.xlane.f32.xlu0 %v49
  %v51 = vpop.xlane.xlu0 %50
  %v52 = vmax.f32 %v48, 1e-24
  %v53 = vmax.f32 %v51, 1e-24
  %v54 = vrsqrt.pop %v52
  %v55 = vrsqrt.pop %v53
  %v56 = vmul.f32 %v21, %v54
  %v57 = vmul.f32 %v22, %v55
  %v58 = vmul.f32 %v23, %v42
  %v59 = vmul.f32 %v24, %v43
  %62 = vrot.lane.b32.xlu0 %v42, 112
  %v63 = vpop.permute.xlu0 %62
  %64 = vrot.lane.b32.xlu0 %v43, 112
  %v65 = vpop.permute.xlu0 %64
  %v68 = vmul.f32 %v23, %v63
  %v69 = vmul.f32 %v24, %v65
  %70 = vrot.lane.b32.xlu0 %v42, 16
  %v71 = vpop.permute.xlu0 %70
  %72 = vrot.lane.b32.xlu0 %v43, 16
  %v73 = vpop.permute.xlu0 %72
  %v76 = vmul.f32 %v23, %v71
  %v77 = vmul.f32 %v24, %v73
  %v78 = vsel %vm27, 1, 0
  %v79 = vsel %vm28, 1, 0
  %80 = vset.pattern.permute.xlu0 0
  %81 = vperm.xlu0 %80, %v78
  %v82 = vpop.permute.xlu0 %81
  %83 = vset.pattern.permute.xlu0 0
  %84 = vperm.xlu0 %83, %v79
  %v85 = vpop.permute.xlu0 %84
  %vm86 = vcmp.eq.s32.totalorder %v82, 1
  %vm87 = vcmp.eq.s32.totalorder %v85, 1
  %v88 = vsel %vm86, %v58, 0.0
  %v89 = vsel %vm87, %v59, 0.0
  %92 = vrot.lane.b32.xlu0 %v88, 112
  %v93 = vpop.permute.xlu0 %92
  %94 = vrot.lane.b32.xlu0 %v89, 112
  %v95 = vpop.permute.xlu0 %94
  %v98 = vadd.f32 %v58, %v93
  %v99 = vadd.f32 %v59, %v95
  %102 = vrot.lane.b32.xlu0 %v58, 112
  %v103 = vpop.permute.xlu0 %102
  %104 = vrot.lane.b32.xlu0 %v59, 112
  %v105 = vpop.permute.xlu0 %104
  %v108 = vsub.f32 %v68, %v103
  %v109 = vsub.f32 %v69, %v105
  %v110 = vsel %vm86, 0.0, %v76
  %v111 = vsel %vm87, 0.0, %v77
  %114 = vrot.lane.b32.xlu0 %v110, 112
  %v115 = vpop.permute.xlu0 %114
  %116 = vrot.lane.b32.xlu0 %v111, 112
  %v117 = vpop.permute.xlu0 %116
  %v120 = vadd.f32 %v108, %v115
  %v121 = vadd.f32 %v109, %v117
  %v122 = vmul.f32 %v98, %v56
  %v123 = vmul.f32 %v99, %v57
  %vm124 = vcmask 130048
  %v125 = vsel %vm124, %v122, 0.0
  %126 = vadd.xlane.f32.xlu0 %v125
  %v127 = vpop.xlane.xlu0 %126
  %v128 = vsel %vm124, %v123, 0.0
  %129 = vadd.xlane.f32.xlu0 %v128
  %v130 = vpop.xlane.xlu0 %129
  %133 = vrot.lane.b32.xlu0 %v56, 112
  %v134 = vpop.permute.xlu0 %133
  %135 = vrot.lane.b32.xlu0 %v57, 112
  %v136 = vpop.permute.xlu0 %135
  %v139 = vmul.f32 %v120, %v134
  %v140 = vmul.f32 %v121, %v136
  %v141 = vsel %vm124, %v139, 0.0
  %142 = vadd.xlane.f32.xlu0 %v141
  %v143 = vpop.xlane.xlu0 %142
  %v144 = vsel %vm124, %v140, 0.0
  %145 = vadd.xlane.f32.xlu0 %v144
  %v146 = vpop.xlane.xlu0 %145
  %v147 = vadd.f32 %v127, %v143
  %v148 = vadd.f32 %v130, %v146
  %v149 = vsub.f32 0.0, %v147
  %v150 = vsub.f32 0.0, %v148
  %vm151 = vcmask 7168
  %152 = vst.msk [vmem:[%s5] sm:$0xff] %vm151, %v149
  %153 = vst.msk [vmem:[%s5 + $0x8] sm:$0xff] %vm151, %v150
  %154 = vst.msk [vmem:[%s4] sm:$0xff] %vm124, %v98
  %155 = vst.msk [vmem:[%s4 + $0x8] sm:$0xff] %vm124, %v99
  %158 = vrot.lane.b32.xlu0 %v120, 16
  %v159 = vpop.permute.xlu0 %158
  %160 = vrot.lane.b32.xlu0 %v121, 16
  %v161 = vpop.permute.xlu0 %160
  %vm164 = vcmask 261248
  %165 = vst.msk [vmem:[%s4] sm:$0xff] %vm164, %v159
  %166 = vst.msk [vmem:[%s4 + $0x8] sm:$0xff] %vm164, %v161
  // Predicated region
  $region18: #{complex_decoder_forward.2} parent=0 // pred_check
    _
  $region19: #{complex_decoder_forward.2} parent=0 // pred_check_branch
    %168 = sbr.rel (0) target = $region21
  $region20: #{complex_decoder_forward.2} parent=0 // pred_region
    _
  $region21: #{complex_decoder_forward.2} parent=0 // pred_fallthru
    _
  // Predicated region
  $region22: #{complex_decoder_forward.2} parent=0 // pred_check
    _
  $region23: #{complex_decoder_forward.2} parent=0 // pred_check_branch
    %170 = sbr.rel (0) target = $region25
  $region24: #{complex_decoder_forward.2} parent=0 // pred_region
    _
  $region25: #{complex_decoder_forward.2} parent=0 // pred_fallthru
    _
  // Predicated region
  $region26: #{complex_decoder_forward.2} parent=0 // pred_check
    _
  $region27: #{complex_decoder_forward.2} parent=0 // pred_check_branch
    %172 = sbr.rel (0) target = $region29
  $region28: #{complex_decoder_forward.2} parent=0 // pred_region
    _
  $region29: #{complex_decoder_forward.2} parent=0 // pred_fallthru
    _
  // Predicated region
  $region30: #{complex_decoder_forward.2} parent=0 // pred_check
    _
  $region31: #{complex_decoder_forward.2} parent=0 // pred_check_branch
    %174 = sbr.rel (0) target = $region33
  $region32: #{complex_decoder_forward.2} parent=0 // pred_region
    _
  $region33: #{complex_decoder_forward.2} parent=0 // pred_fallthru
    _

// kernel: complex_decoder_forward.3
$region0: #{complex_decoder_forward.3}
  #allocation0 [shape = 'u32[]', space=smem, size = 0x4, offset = 0x4, fixed_abs, tag = 'smem constant byte address 0x4 - core index']
  #allocation1 [shape = 'u32[144,128]{1,0:T(1,128)}', space=vmem, size = 0x12000, scoped, tag = 'internal scratch']
  %s0 = inlined_call_operand.vmem [shape: f32[16,32], index: 0, kind: input, shape index: {}]
  %s1 = inlined_call_operand.vmem [shape: f32[128,32], index: 1, kind: input, shape index: {}]
  %s2 = inlined_call_operand.vmem [shape: f32[16,128], index: 2, kind: output, shape index: {}]
  %s3 = sld [smem:[#allocation0]]
  $region18: #{complex_decoder_forward.3} parent=0
    _
  %s5 = ssub.s32 1, %s3
  %s6 = scalar_select 0, %s5, %s3
  // Predicated region
  $region2: #{complex_decoder_forward.3} parent=0 // pred_check
    _
  $region3: #{complex_decoder_forward.3} parent=0 // pred_check_branch
    %8 = sbr.rel (0) target = $region5
  $region4: #{complex_decoder_forward.3} parent=0 // pred_region
    _
  $region5: #{complex_decoder_forward.3} parent=0 // pred_fallthru
    _
  // Predicated region
  $region6: #{complex_decoder_forward.3} parent=0 // pred_check
    _
  $region7: #{complex_decoder_forward.3} parent=0 // pred_check_branch
    %10 = sbr.rel (0) target = $region9
  $region8: #{complex_decoder_forward.3} parent=0 // pred_region
    _
  $region9: #{complex_decoder_forward.3} parent=0 // pred_fallthru
    _
  %v11 = vld [vmem:[%s1] sm:$0xff]
  %v12 = vld [vmem:[%s1 + $0x8] sm:$0xff]
  %v13 = vld [vmem:[%s1 + $0x10] sm:$0xff]
  %v14 = vld [vmem:[%s1 + $0x18] sm:$0xff]
  %v15 = vld [vmem:[%s1 + $0x20] sm:$0xff]
  %v16 = vld [vmem:[%s1 + $0x28] sm:$0xff]
  %v17 = vld [vmem:[%s1 + $0x30] sm:$0xff]
  %v18 = vld [vmem:[%s1 + $0x38] sm:$0xff]
  %v19 = vld [vmem:[%s1 + $0x40] sm:$0xff]
  %v20 = vld [vmem:[%s1 + $0x48] sm:$0xff]
  %v21 = vld [vmem:[%s1 + $0x50] sm:$0xff]
  %v22 = vld [vmem:[%s1 + $0x58] sm:$0xff]
  %v23 = vld [vmem:[%s1 + $0x60] sm:$0xff]
  %v24 = vld [vmem:[%s1 + $0x68] sm:$0xff]
  %v25 = vld [vmem:[%s1 + $0x70] sm:$0xff]
  %v26 = vld [vmem:[%s1 + $0x78] sm:$0xff]
  %v27 = vmul.f32 %v11, %v11
  %v28 = vmul.f32 %v12, %v12
  %v29 = vmul.f32 %v13, %v13
  %v30 = vmul.f32 %v14, %v14
  %v31 = vmul.f32 %v15, %v15
  %v32 = vmul.f32 %v16, %v16
  %v33 = vmul.f32 %v17, %v17
  %v34 = vmul.f32 %v18, %v18
  %v35 = vmul.f32 %v19, %v19
  %v36 = vmul.f32 %v20, %v20
  %v37 = vmul.f32 %v21, %v21
  %v38 = vmul.f32 %v22, %v22
  %v39 = vmul.f32 %v23, %v23
  %v40 = vmul.f32 %v24, %v24
  %v41 = vmul.f32 %v25, %v25
  %v42 = vmul.f32 %v26, %v26
  %vm43 = vcmask 261120
  %v44 = vsel %vm43, %v27, 0.0
  %45 = vadd.xlane.f32.xlu0 %v44
  %v46 = vpop.xlane.xlu0 %45
  %v47 = vsel %vm43, %v28, 0.0
  %48 = vadd.xlane.f32.xlu0 %v47
  %v49 = vpop.xlane.xlu0 %48
  %v50 = vsel %vm43, %v29, 0.0
  %51 = vadd.xlane.f32.xlu0 %v50
  %v52 = vpop.xlane.xlu0 %51
  %v53 = vsel %vm43, %v30, 0.0
  %54 = vadd.xlane.f32.xlu0 %v53
  %v55 = vpop.xlane.xlu0 %54
  %v56 = vsel %vm43, %v31, 0.0
  %57 = vadd.xlane.f32.xlu0 %v56
  %v58 = vpop.xlane.xlu0 %57
  %v59 = vsel %vm43, %v32, 0.0
  %60 = vadd.xlane.f32.xlu0 %v59
  %v61 = vpop.xlane.xlu0 %60
  %v62 = vsel %vm43, %v33, 0.0
  %63 = vadd.xlane.f32.xlu0 %v62
  %v64 = vpop.xlane.xlu0 %63
  %v65 = vsel %vm43, %v34, 0.0
  %66 = vadd.xlane.f32.xlu0 %v65
  %v67 = vpop.xlane.xlu0 %66
  %v68 = vsel %vm43, %v35, 0.0
  %69 = vadd.xlane.f32.xlu0 %v68
  %v70 = vpop.xlane.xlu0 %69
  %v71 = vsel %vm43, %v36, 0.0
  %72 = vadd.xlane.f32.xlu0 %v71
  %v73 = vpop.xlane.xlu0 %72
  %v74 = vsel %vm43, %v37, 0.0
  %75 = vadd.xlane.f32.xlu0 %v74
  %v76 = vpop.xlane.xlu0 %75
  %v77 = vsel %vm43, %v38, 0.0
  %78 = vadd.xlane.f32.xlu0 %v77
  %v79 = vpop.xlane.xlu0 %78
  %v80 = vsel %vm43, %v39, 0.0
  %81 = vadd.xlane.f32.xlu0 %v80
  %v82 = vpop.xlane.xlu0 %81
  %v83 = vsel %vm43, %v40, 0.0
  %84 = vadd.xlane.f32.xlu0 %v83
  %v85 = vpop.xlane.xlu0 %84
  %v86 = vsel %vm43, %v41, 0.0
  %87 = vadd.xlane.f32.xlu0 %v86
  %v88 = vpop.xlane.xlu0 %87
  %v89 = vsel %vm43, %v42, 0.0
  %90 = vadd.xlane.f32.xlu0 %v89
  %v91 = vpop.xlane.xlu0 %90
  %v92 = vmax.f32 %v46, 1e-24
  %v93 = vmax.f32 %v49, 1e-24
  %v94 = vmax.f32 %v52, 1e-24
  %v95 = vmax.f32 %v55, 1e-24
  %v96 = vmax.f32 %v58, 1e-24
  %v97 = vmax.f32 %v61, 1e-24
  %v98 = vmax.f32 %v64, 1e-24
  %v99 = vmax.f32 %v67, 1e-24
  %v100 = vmax.f32 %v70, 1e-24
  %v101 = vmax.f32 %v73, 1e-24
  %v102 = vmax.f32 %v76, 1e-24
  %v103 = vmax.f32 %v79, 1e-24
  %v104 = vmax.f32 %v82, 1e-24
  %v105 = vmax.f32 %v85, 1e-24
  %v106 = vmax.f32 %v88, 1e-24
  %v107 = vmax.f32 %v91, 1e-24
  %v108 = vrsqrt.pop %v92
  %v109 = vrsqrt.pop %v93
  %v110 = vrsqrt.pop %v94
  %v111 = vrsqrt.pop %v95
  %v112 = vrsqrt.pop %v96
  %v113 = vrsqrt.pop %v97
  %v114 = vrsqrt.pop %v98
  %v115 = vrsqrt.pop %v99
  %v116 = vrsqrt.pop %v100
  %v117 = vrsqrt.pop %v101
  %v118 = vrsqrt.pop %v102
  %v119 = vrsqrt.pop %v103
  %v120 = vrsqrt.pop %v104
  %v121 = vrsqrt.pop %v105
  %v122 = vrsqrt.pop %v106
  %v123 = vrsqrt.pop %v107
  %v124 = vmul.f32 %v11, %v108
  %v125 = vmul.f32 %v12, %v109
  %v126 = vmul.f32 %v13, %v110
  %v127 = vmul.f32 %v14, %v111
  %v128 = vmul.f32 %v15, %v112
  %v129 = vmul.f32 %v16, %v113
  %v130 = vmul.f32 %v17, %v114
  %v131 = vmul.f32 %v18, %v115
  %v132 = vmul.f32 %v19, %v116
  %v133 = vmul.f32 %v20, %v117
  %v134 = vmul.f32 %v21, %v118
  %v135 = vmul.f32 %v22, %v119
  %v136 = vmul.f32 %v23, %v120
  %v137 = vmul.f32 %v24, %v121
  %v138 = vmul.f32 %v25, %v122
  %v139 = vmul.f32 %v26, %v123
  %v140 = vld [vmem:[%s0] sm:$0xff]
  %v141 = vld [vmem:[%s0 + $0x8] sm:$0xff]
  %v143 = vsel %vm43, %v140, 0
  %v146 = vsel %vm43, %v141, 0
  %v149 = vsel %vm43, %v124, 0
  %v152 = vsel %vm43, %v125, 0
  %v155 = vsel %vm43, %v126, 0
  %v158 = vsel %vm43, %v127, 0
  %v161 = vsel %vm43, %v128, 0
  %v164 = vsel %vm43, %v129, 0
  %v167 = vsel %vm43, %v130, 0
  %v170 = vsel %vm43, %v131, 0
  %v173 = vsel %vm43, %v132, 0
  %v176 = vsel %vm43, %v133, 0
  %v179 = vsel %vm43, %v134, 0
  %v182 = vsel %vm43, %v135, 0
  %v185 = vsel %vm43, %v136, 0
  %v188 = vsel %vm43, %v137, 0
  %v191 = vsel %vm43, %v138, 0
  %v194 = vsel %vm43, %v139, 0
  %196 = vmatprep.subr.mxu0 0.0
  %197 = vmatpush1.xpose.msra.mxu0 %v149
  %198 = vmatprep.subr.mxu0 0.0
  %199 = vmatpush1.xpose.msra.mxu0 %v152
  %200 = vmatprep.subr.mxu0 0.0
  %201 = vmatpush1.xpose.msra.mxu0 %v155
  %202 = vmatprep.subr.mxu0 0.0
  %203 = vmatpush1.xpose.msra.mxu0 %v158
  %204 = vmatprep.subr.mxu0 0.0
  %205 = vmatpush1.xpose.msra.mxu0 %v161
  %206 = vmatprep.subr.mxu0 0.0
  %207 = vmatpush1.xpose.msra.mxu0 %v164
  %208 = vmatprep.subr.mxu0 0.0
  %209 = vmatpush1.xpose.msra.mxu0 %v167
  %210 = vmatprep.subr.mxu0 0.0
  %211 = vmatpush1.xpose.msra.mxu0 %v170
  %212 = vmatprep.subr.mxu0 0.0
  %213 = vmatpush1.xpose.msra.mxu0 %v173
  %214 = vmatprep.subr.mxu0 0.0
  %215 = vmatpush1.xpose.msra.mxu0 %v176
  %216 = vmatprep.subr.mxu0 0.0
  %217 = vmatpush1.xpose.msra.mxu0 %v179
  %218 = vmatprep.subr.mxu0 0.0
  %219 = vmatpush1.xpose.msra.mxu0 %v182
  %220 = vmatprep.subr.mxu0 0.0
  %221 = vmatpush1.xpose.msra.mxu0 %v185
  %222 = vmatprep.subr.mxu0 0.0
  %223 = vmatpush1.xpose.msra.mxu0 %v188
  %224 = vmatprep.subr.mxu0 0.0
  %225 = vmatpush1.xpose.msra.mxu0 %v191
  %226 = vmatprep.subr.mxu0 0.0
  %227 = vmatpush1.xpose.msra.mxu0 %v194
  %228 = vmatprep.subr.mxu0 0.0
  %229 = vmatpush1.xpose.msra.mxu0 0.0
  %230 = vmatprep.subr.mxu0 0.0
  %231 = vmatpush1.xpose.msra.mxu0 0.0
  %232 = vmatprep.subr.mxu0 0.0
  %233 = vmatpush1.xpose.msra.mxu0 0.0
  %234 = vmatprep.subr.mxu0 0.0
  %235 = vmatpush1.xpose.msra.mxu0 0.0
  %236 = vmatprep.subr.mxu0 0.0
  %237 = vmatpush1.xpose.msra.mxu0 0.0
  %238 = vmatprep.subr.mxu0 0.0
  %239 = vmatpush1.xpose.msra.mxu0 0.0
  %240 = vmatprep.subr.mxu0 0.0
  %241 = vmatpush1.xpose.msra.mxu0 0.0
  %242 = vmatprep.subr.mxu0 0.0
  %243 = vmatpush1.xpose.msra.mxu0 0.0
  %244 = vmatprep.subr.mxu0 0.0
  %245 = vmatpush1.xpose.msra.mxu0 0.0
  %246 = vmatprep.subr.mxu0 0.0
  %247 = vmatpush1.xpose.msra.mxu0 0.0
  %248 = vmatprep.subr.mxu0 0.0
  %249 = vmatpush1.xpose.msra.mxu0 0.0
  %250 = vmatprep.subr.mxu0 0.0
  %251 = vmatpush1.xpose.msra.mxu0 0.0
  %252 = vmatprep.subr.mxu0 0.0
  %253 = vmatpush1.xpose.msra.mxu0 0.0
  %254 = vmatprep.subr.mxu0 0.0
  %255 = vmatpush1.xpose.msra.mxu0 0.0
  %256 = vmatprep.subr.mxu0 0.0
  %257 = vmatpush1.xpose.msra.mxu0 0.0
  %258 = vmatprep.subr.mxu0 0.0
  %259 = vmatpush1.xpose.msra.mxu0 0.0
  %260 = vmatprep.mubr.f32.mxu0 0.0
  %261 = vmatmul.mubr.f32.gmra.mrb[0].mxu0 %v143
  %v262 = vpop.f32.mrb[0].mxu0
  %v263 = vadd.f32 0.0, %v262
  %v264 = vpop.f32.mrb[0].mxu0
  %265 = vmatprep.mubr.f32.mxu0 0.0
  %266 = vmatmul.mubr.f32.gmra.mrb[0].mxu0 %v146
  %v267 = vpop.f32.mrb[0].mxu0
  %v268 = vadd.f32 0.0, %v267
  %v269 = vpop.f32.mrb[0].mxu0
  %270 = vdwg.mxu0
  %v271 = vsub.f32 0.0, %v263
  %v272 = vsub.f32 0.0, %v268
  %273 = vst [vmem:[%s2] sm:$0xff] %v271
  %274 = vst [vmem:[%s2 + $0x8] sm:$0xff] %v272
  // Predicated region
  $region10: #{complex_decoder_forward.3} parent=0 // pred_check
    _
  $region11: #{complex_decoder_forward.3} parent=0 // pred_check_branch
    %276 = sbr.rel (0) target = $region13
  $region12: #{complex_decoder_forward.3} parent=0 // pred_region
    _
  $region13: #{complex_decoder_forward.3} parent=0 // pred_fallthru
    _
  // Predicated region
  $region14: #{complex_decoder_forward.3} parent=0 // pred_check
    _
  $region15: #{complex_decoder_forward.3} parent=0 // pred_check_branch
    %278 = sbr.rel (0) target = $region17
  $region16: #{complex_decoder_forward.3} parent=0 // pred_region
    _
  $region17: #{complex_decoder_forward.3} parent=0 // pred_fallthru
    _

</llo_original>
